<compile_context>
chip_gen: v5e
topology: v5e:2x2
jax: 0.10.0
libtpu: 0.0.40
codegen_flags: <defaults>
</compile_context>

<pallas_src>
import functools

import jax
import jax.numpy as jnp
from jax import lax
from jax.experimental import pallas as pl
from jax.experimental.pallas import tpu as pltpu

_LANE = 128  # pad the hidden width to a lane multiple


def _mlp(z, w1, b1b, w2, b2b, mxu_dtype):
    """tanh(linear2(tanh(linear1(z)))) with f32 MXU accumulation.

    b1b/b2b are already broadcast to (B, mid) / (B, H) — hoisted by callers so
    no broadcast_in_dim is re-materialized per Euler step.
    """
    h = jnp.tanh(
        jnp.dot(z.astype(mxu_dtype), w1, preferred_element_type=jnp.float32)
        + b1b)
    return jnp.tanh(
        jnp.dot(h.astype(mxu_dtype), w2, preferred_element_type=jnp.float32)
        + b2b)


# -----------------------------------------------------------------------------
# Kernel 1: single forward evaluation f(t, z)  (exactly the module's forward).
# Kept for the module contract; prefer the fused Euler kernel as the hot path.
# -----------------------------------------------------------------------------
def _forward_kernel(z_ref, w1_ref, b1_ref, w2_ref, b2_ref, o_ref, *, mxu_dtype):
    B = z_ref.shape[0]
    w1 = w1_ref[...].astype(mxu_dtype)
    w2 = w2_ref[...].astype(mxu_dtype)
    b1b = jnp.broadcast_to(b1_ref[...], (B, w1_ref.shape[1]))
    b2b = jnp.broadcast_to(b2_ref[...], (B, w2_ref.shape[1]))
    z = z_ref[...].astype(jnp.float32)
    o_ref[...] = _mlp(z, w1, b1b, w2, b2b, mxu_dtype).astype(o_ref.dtype)


def _io_bytes(*arrays):
    return int(sum(a.size * a.dtype.itemsize for a in arrays))


def ode_func_forward(z, w1p, b1p, w2p, b2p, mxu_dtype=jnp.float32):
    """z: [B, H]; padded params from prepare_params()."""
    B, H = z.shape
    mid = w1p.shape[1]
    vmem = pl.BlockSpec(memory_space=pltpu.MemorySpace.VMEM)
    cost = pl.CostEstimate(
        flops=4 * B * H * mid,                 # two matmuls: 2*B*H*mid each
        transcendentals=B * (mid + H),         # two tanh layers
        bytes_accessed=_io_bytes(z, w1p, b1p, w2p, b2p, z),
    )
    return pl.pallas_call(
        functools.partial(_forward_kernel, mxu_dtype=mxu_dtype),
        out_shape=jax.ShapeDtypeStruct((B, H), z.dtype),
        in_specs=[vmem] * 5,
        out_specs=vmem,
        cost_estimate=cost,
    )(z, w1p, b1p, w2p, b2p)


# -----------------------------------------------------------------------------
# Kernel 2: fused fixed-step Euler integrator — many f-evaluations per launch.
# Weights stay VMEM-resident across the whole loop; step count / dt are
# compile-time constants so the loop can be unrolled for the LLO scheduler.
# -----------------------------------------------------------------------------
def _euler_kernel(z_ref, w1_ref, b1_ref, w2_ref, b2_ref, o_ref, *,
                  num_steps, dt, unroll, mxu_dtype):
    B = z_ref.shape[0]
    # Hoisted once: weight loads/casts and bias broadcasts (no per-iteration
    # re-load, re-cast or broadcast_in_dim re-materialization).
    w1 = w1_ref[...].astype(mxu_dtype)
    w2 = w2_ref[...].astype(mxu_dtype)
    b1b = jnp.broadcast_to(b1_ref[...], (B, w1_ref.shape[1]))
    b2b = jnp.broadcast_to(b2_ref[...], (B, w2_ref.shape[1]))
    dt_f = jnp.float32(dt)

    z0 = z_ref[...].astype(jnp.float32)

    def body(_, z):
        return z + dt_f * _mlp(z, w1, b1b, w2, b2b, mxu_dtype)

    zf = lax.fori_loop(0, num_steps, body, z0, unroll=unroll)
    o_ref[...] = zf.astype(o_ref.dtype)


def ode_func_euler(z, w1p, b1p, w2p, b2p, num_steps, dt,
                   mxu_dtype=jnp.float32):
    """Integrate z' = f(z) with forward Euler for `num_steps` steps of `dt`.

    num_steps / dt are compile-time constants (one compiled kernel per step
    count) — that buys full loop unrolling / bundle packing across steps.
    """
    B, H = z.shape
    mid = w1p.shape[1]
    num_steps = int(num_steps)
    unroll = True if num_steps <= 16 else 8
    vmem = pl.BlockSpec(memory_space=pltpu.MemorySpace.VMEM)
    cost = pl.CostEstimate(
        flops=num_steps * 4 * B * H * mid,
        transcendentals=num_steps * B * (mid + H),
        bytes_accessed=_io_bytes(z, w1p, b1p, w2p, b2p, z),
    )
    kernel = functools.partial(
        _euler_kernel, num_steps=num_steps, dt=float(dt), unroll=unroll,
        mxu_dtype=mxu_dtype)
    return pl.pallas_call(
        kernel,
        out_shape=jax.ShapeDtypeStruct((B, H), z.dtype),
        in_specs=[vmem] * 5,
        out_specs=vmem,
        cost_estimate=cost,
    )(z, w1p, b1p, w2p, b2p)


# -----------------------------------------------------------------------------
# Parameters
# -----------------------------------------------------------------------------
def init_params(key, hidden_channels, mid=60, dtype=jnp.float32):
    """Mimics torch.nn.Linear's uniform(-1/sqrt(fan_in), ...) init.
    Weights stored as [in, out] (transpose of PyTorch's [out, in])."""
    k1, k2, k3, k4 = jax.random.split(key, 4)
    bound1 = 1.0 / (hidden_channels ** 0.5)
    bound2 = 1.0 / (mid ** 0.5)
    w1 = jax.random.uniform(k1, (hidden_channels, mid), dtype, -bound1, bound1)
    b1 = jax.random.uniform(k2, (1, mid), dtype, -bound1, bound1)
    w2 = jax.random.uniform(k3, (mid, hidden_channels), dtype, -bound2, bound2)
    b2 = jax.random.uniform(k4, (1, hidden_channels), dtype, -bound2, bound2)
    return w1, b1, w2, b2


def prepare_params(w1, b1, w2, b2):
    """One-time zero-pad of the hidden width (60 -> next multiple of 128, the
    lane width) so the hidden activation / tanh / first matmul output are
    full, unmasked vregs.  b1 is zero-padded so the padded hidden columns are
    tanh(0)=0 and hit zero rows of w2 -> numerically inert."""
    _, mid = w1.shape
    mid_pad = -(-mid // _LANE) * _LANE
    pad = mid_pad - mid
    w1p = jnp.pad(w1, ((0, 0), (0, pad)))
    b1p = jnp.pad(b1, ((0, 0), (0, pad)))
    w2p = jnp.pad(w2, ((0, pad), (0, 0)))
    return w1p, b1p, w2p, b2


def ode_func_ref(z, w1, b1, w2, b2):
    h = jnp.tanh(z @ w1 + b1)
    return jnp.tanh(h @ w2 + b2)


if __name__ == "__main__":
    batch = 8
    hidden_channels = 32

    key = jax.random.PRNGKey(0)
    k_z, k_p = jax.random.split(key)
    z = jax.random.normal(k_z, (batch, hidden_channels), dtype=jnp.float32)
    t = jnp.float32(0.0)  # `t` is unused by the module's forward

    w1, b1, w2, b2 = init_params(k_p, hidden_channels)          # module layout
    w1p, b1p, w2p, b2p = prepare_params(w1, b1, w2, b2)         # kernel layout

    # --- single forward evaluation (the module's forward) -------------------
    out = jax.block_until_ready(ode_func_forward(z, w1p, b1p, w2p, b2p))
    ref = ode_func_ref(z, w1, b1, w2, b2)
    assert out.shape == (batch, hidden_channels)
    assert jnp.allclose(out, ref, atol=1e-5, rtol=1e-5), "forward mismatch"

    # --- fused Euler loop: N f-evals inside one pallas_call ------------------
    num_steps, dt = 5, 0.1
    out_e = jax.block_until_ready(
        ode_func_euler(z, w1p, b1p, w2p, b2p, num_steps, dt))
    z_r = z
    for _ in range(num_steps):
        z_r = z_r + dt * ode_func_ref(z_r, w1, b1, w2, b2)
    assert jnp.allclose(out_e, z_r, atol=1e-4, rtol=1e-5), "euler mismatch"

    print("KERNEL_OK")
</pallas_src>

<mosaic_0001>
module attributes {stable_mosaic.version = 11 : i64} {
  func.func @_forward_kernel(%arg0: memref<8x32xf32, #tpu.memory_space<vmem>>, %arg1: memref<32x128xf32, #tpu.memory_space<vmem>>, %arg2: memref<1x128xf32, #tpu.memory_space<vmem>>, %arg3: memref<128x32xf32, #tpu.memory_space<vmem>>, %arg4: memref<1x32xf32, #tpu.memory_space<vmem>>, %arg5: memref<8x32xf32, #tpu.memory_space<vmem>>) attributes {dimension_semantics = [], scalar_prefetch = 0 : i64, scratch_operands = 0 : i64, tpu.core_type = #tpu.core_type<tc>} {
    %c0 = arith.constant 0 : index
    %c0_0 = arith.constant 0 : index
    %0 = vector.load %arg1[%c0, %c0_0] : memref<32x128xf32, #tpu.memory_space<vmem>>, vector<32x128xf32>
    %c0_1 = arith.constant 0 : index
    %c0_2 = arith.constant 0 : index
    %1 = vector.load %arg3[%c0_1, %c0_2] : memref<128x32xf32, #tpu.memory_space<vmem>>, vector<128x32xf32>
    %c0_3 = arith.constant 0 : index
    %c0_4 = arith.constant 0 : index
    %2 = vector.load %arg2[%c0_3, %c0_4] : memref<1x128xf32, #tpu.memory_space<vmem>>, vector<1x128xf32>
    %3 = vector.shape_cast %2 : vector<1x128xf32> to vector<1x128xf32>
    %4 = vector.broadcast %3 : vector<1x128xf32> to vector<8x128xf32>
    %c0_5 = arith.constant 0 : index
    %c0_6 = arith.constant 0 : index
    %5 = vector.load %arg4[%c0_5, %c0_6] : memref<1x32xf32, #tpu.memory_space<vmem>>, vector<1x32xf32>
    %6 = vector.shape_cast %5 : vector<1x32xf32> to vector<1x32xf32>
    %7 = vector.broadcast %6 : vector<1x32xf32> to vector<8x32xf32>
    %c0_7 = arith.constant 0 : index
    %c0_8 = arith.constant 0 : index
    %8 = vector.load %arg0[%c0_7, %c0_8] : memref<8x32xf32, #tpu.memory_space<vmem>>, vector<8x32xf32>
    %cst = arith.constant dense<0.000000e+00> : vector<8x128xf32>
    %9 = tpu.matmul %8, %0, %cst {dimension_numbers = #tpu.dot_dimension_numbers<[1], [0], [0], [1], [0, 0, 1, 1], [], []>} : vector<8x32xf32>, vector<32x128xf32>, vector<8x128xf32> -> vector<8x128xf32>
    %10 = arith.addf %9, %4 : vector<8x128xf32>
    %11 = math.tanh %10 : vector<8x128xf32>
    %cst_9 = arith.constant dense<0.000000e+00> : vector<8x32xf32>
    %12 = tpu.matmul %11, %1, %cst_9 {dimension_numbers = #tpu.dot_dimension_numbers<[1], [0], [0], [1], [0, 0, 1, 1], [], []>} : vector<8x128xf32>, vector<128x32xf32>, vector<8x32xf32> -> vector<8x32xf32>
    %13 = arith.addf %12, %7 : vector<8x32xf32>
    %14 = math.tanh %13 : vector<8x32xf32>
    %c0_10 = arith.constant 0 : index
    %c0_11 = arith.constant 0 : index
    %15 = vector.load %arg5[%c0_10, %c0_11] : memref<8x32xf32, #tpu.memory_space<vmem>>, vector<8x32xf32>
    tpu.vector_store %arg5[%c0_10, %c0_11], %14 {strides = array<i32>} : memref<8x32xf32, #tpu.memory_space<vmem>>, vector<8x32xf32>,
    return
  }
}

</mosaic_0001>

<llo_original>
// kernel: tpu_custom_call.1
$region0: #{tpu_custom_call.1}
  #allocation0 [shape = 'u32[]', space=smem, size = 0x4, offset = 0x4, fixed_abs, tag = 'smem constant byte address 0x4 - core index']
  #allocation1 [shape = 'u32[72,128]{1,0:T(1,128)}', space=vmem, size = 0x9000, scoped, tag = 'internal scratch']
  %s0 = inlined_call_operand.vmem [shape: f32[8,32], index: 0, kind: input, shape index: {}]
  %s1 = inlined_call_operand.vmem [shape: f32[32,128], index: 1, kind: input, shape index: {}]
  %s2 = inlined_call_operand.vmem [shape: f32[1,128], index: 2, kind: input, shape index: {}]
  %s3 = inlined_call_operand.vmem [shape: f32[128,32], index: 3, kind: input, shape index: {}]
  %s4 = inlined_call_operand.vmem [shape: f32[1,32], index: 4, kind: input, shape index: {}]
  %s5 = inlined_call_operand.hbm [shape: f32[8,32], index: 5, kind: output, shape index: {}]
  %s6 = sld [smem:[#allocation0]]
  $region30: #{tpu_custom_call.1} parent=0
    _
  %s8 = ssub.s32 1, %s6
  %s9 = scalar_select 0, %s8, %s6
  $region1: #{tpu_custom_call.1} parent=0
    #allocation2 [shape = 'u8[4096]{0}', space=vmem, size = 0x1000, scoped, tag = 'output window, operand 0, single buffered']
    #allocation3 [shape = 's32[1]{0}', space=sflag, size = 0x4, scoped, tag = 'scoped memory for tpu_custom_call.1']
    %10 = vsyncpa [#allocation3], 0
    // Predicated region
    $region2: #{tpu_custom_call.1} parent=1 // pred_check
      _
    $region3: #{tpu_custom_call.1} parent=1 // pred_check_branch
      %12 = sbr.rel (0) target = $region5
    $region4: #{tpu_custom_call.1} parent=1 // pred_region
      _
    $region5: #{tpu_custom_call.1} parent=1 // pred_fallthru
      _
    // Predicated region
    $region6: #{tpu_custom_call.1} parent=1 // pred_check
      _
    $region7: #{tpu_custom_call.1} parent=1 // pred_check_branch
      %14 = sbr.rel (0) target = $region9
    $region8: #{tpu_custom_call.1} parent=1 // pred_region
      _
    $region9: #{tpu_custom_call.1} parent=1 // pred_fallthru
      _
    // Predicated region
    $region10: #{tpu_custom_call.1} parent=1 // pred_check
      _
    $region11: #{tpu_custom_call.1} parent=1 // pred_check_branch
      %16 = sbr.rel (0) target = $region13
    $region12: #{tpu_custom_call.1} parent=1 // pred_region
      _
    $region13: #{tpu_custom_call.1} parent=1 // pred_fallthru
      _
    // Predicated region
    $region14: #{tpu_custom_call.1} parent=1 // pred_check
      _
    $region15: #{tpu_custom_call.1} parent=1 // pred_check_branch
      %18 = sbr.rel (0) target = $region17
    $region16: #{tpu_custom_call.1} parent=1 // pred_region
      _
    $region17: #{tpu_custom_call.1} parent=1 // pred_fallthru
      _
    // Predicated region
    $region18: #{tpu_custom_call.1} parent=1 // pred_check
      _
    $region19: #{tpu_custom_call.1} parent=1 // pred_check_branch
      %20 = sbr.rel (0) target = $region21
    $region20: #{tpu_custom_call.1} parent=1 // pred_region
      _
    $region21: #{tpu_custom_call.1} parent=1 // pred_fallthru
      _
    %v21 = vld [vmem:[%s1] sm:$0xff]
    %v22 = vld [vmem:[%s1 + $0x8] sm:$0xff]
    %v23 = vld [vmem:[%s1 + $0x10] sm:$0xff]
    %v24 = vld [vmem:[%s1 + $0x18] sm:$0xff]
    %v25 = vld [vmem:[%s3] sm:$0xff]
    %v26 = vld [vmem:[%s3 + $0x8] sm:$0xff]
    %v27 = vld [vmem:[%s3 + $0x10] sm:$0xff]
    %v28 = vld [vmem:[%s3 + $0x18] sm:$0xff]
    %v29 = vld [vmem:[%s3 + $0x20] sm:$0xff]
    %v30 = vld [vmem:[%s3 + $0x28] sm:$0xff]
    %v31 = vld [vmem:[%s3 + $0x30] sm:$0xff]
    %v32 = vld [vmem:[%s3 + $0x38] sm:$0xff]
    %v33 = vld [vmem:[%s3 + $0x40] sm:$0xff]
    %v34 = vld [vmem:[%s3 + $0x48] sm:$0xff]
    %v35 = vld [vmem:[%s3 + $0x50] sm:$0xff]
    %v36 = vld [vmem:[%s3 + $0x58] sm:$0xff]
    %v37 = vld [vmem:[%s3 + $0x60] sm:$0xff]
    %v38 = vld [vmem:[%s3 + $0x68] sm:$0xff]
    %v39 = vld [vmem:[%s3 + $0x70] sm:$0xff]
    %v40 = vld [vmem:[%s3 + $0x78] sm:$0xff]
    %v41 = vld [vmem:[%s2] sm:$0x1]
    %v43 = vperm.slane %v41, 0
    %v45 = vld [vmem:[%s4] sm:$0x1]
    %v47 = vperm.slane %v45, 0
    %v49 = vld [vmem:[%s0] sm:$0xff]
    %vm50 = vcmask 261120
    %v52 = vsel %vm50, %v49, 0
    %54 = vmatpush.msra.mxu0 0.0
    %55 = vmatpush.msra.mxu0 0.0
    %56 = vmatpush.msra.mxu0 0.0
    %57 = vmatpush.msra.mxu0 0.0
    %58 = vmatpush.msra.mxu0 0.0
    %59 = vmatpush.msra.mxu0 0.0
    %60 = vmatpush.msra.mxu0 0.0
    %61 = vmatpush.msra.mxu0 0.0
    %62 = vmatpush.msra.mxu0 0.0
    %63 = vmatpush.msra.mxu0 0.0
    %64 = vmatpush.msra.mxu0 0.0
    %65 = vmatpush.msra.mxu0 0.0
    %66 = vmatpush.msra.mxu0 %v24
    %67 = vmatpush.msra.mxu0 %v23
    %68 = vmatpush.msra.mxu0 %v22
    %69 = vmatpush.msra.mxu0 %v21
    %70 = vmatmul.f32.gmra.mxu0 %v52
    %v71 = vpop.f32.mrf.mxu0
    %v72 = vadd.f32 %v43, %v71
    %73 = vdwg.mxu0
    %v74 = vtanh.pop %v72
    %75 = vmatpush.msra.mxu0 %v40
    %76 = vmatpush.msra.mxu0 %v39
    %77 = vmatpush.msra.mxu0 %v38
    %78 = vmatpush.msra.mxu0 %v37
    %79 = vmatpush.msra.mxu0 %v36
    %80 = vmatpush.msra.mxu0 %v35
    %81 = vmatpush.msra.mxu0 %v34
    %82 = vmatpush.msra.mxu0 %v33
    %83 = vmatpush.msra.mxu0 %v32
    %84 = vmatpush.msra.mxu0 %v31
    %85 = vmatpush.msra.mxu0 %v30
    %86 = vmatpush.msra.mxu0 %v29
    %87 = vmatpush.msra.mxu0 %v28
    %88 = vmatpush.msra.mxu0 %v27
    %89 = vmatpush.msra.mxu0 %v26
    %90 = vmatpush.msra.mxu0 %v25
    %91 = vmatmul.f32.gmra.mxu0 %v74
    %v92 = vpop.f32.mrf.mxu0
    %v93 = vadd.f32 %v47, %v92
    %94 = vdwg.mxu0
    %v95 = vtanh.pop %v93
    %96 = vst.msk [vmem:[#allocation2] sm:$0xff] %vm50, %v95
    // Predicated region
    $region22: #{tpu_custom_call.1} parent=1 // pred_check
      _
    $region23: #{tpu_custom_call.1} parent=1 // pred_check_branch
      %98 = sbr.rel (0) target = $region25
    $region24: #{tpu_custom_call.1} parent=1 // pred_region
      %100 = vsyncadd [#allocation3], 0
      %s102 = sshll.u32 [#allocation2], 4
      %s103 = int_to_ptr.vmem [resolvable:$true] %s102
      %s104 = sshll.u32 %s5, 4
      %s105 = int_to_ptr.hbm [resolvable:$true] %s104
      %107 = dma.vmem_to_hbm [thread:$0]  %s103, 128, %s105, [#allocation3]
    $region25: #{tpu_custom_call.1} parent=1 // pred_fallthru
      _
    // Predicated region
    $region26: #{tpu_custom_call.1} parent=1 // pred_check
      _
    $region27: #{tpu_custom_call.1} parent=1 // pred_check_branch
      %109 = sbr.rel (0) target = $region29
    $region28: #{tpu_custom_call.1} parent=1 // pred_region
      %111 = dma.done [#allocation3], 128
    $region29: #{tpu_custom_call.1} parent=1 // pred_fallthru
      _
    %112 = vsyncpa [#allocation3], 1

</llo_original>
